<compile_context>
chip_gen: v6e
topology: v6e:2x2x1
jax: 0.10.0
libtpu: 0.0.40
codegen_flags: <defaults>
</compile_context>

<pallas_src>
import jax
import jax.numpy as jnp
from jax import lax
from jax.experimental import pallas as pl
from jax.experimental.pallas import tpu as pltpu


def graph_conv_kernel(x_ref, at_ref, w_ref, o_ref):
    """One grid step: `bb` whole batches, each a full (C_in, T, N) slab.

    x_ref : (bb, C_in, T, N)  NCHW block straight from HBM (no wrapper permute)
    at_ref: (N, N)            A^T, so the node contraction is a natural (K, N) matmul
    w_ref : (C_out, C_in)     1x1-conv weight, squeezed
    o_ref : (bb, C_out, T, N) NCHW output block, written directly
    """
    at = at_ref[...]
    w = w_ref[...]
    bb = x_ref.shape[0]
    for i in range(bb):  # static unroll; every iteration is two large matmuls
        x = x_ref[i]  # (C_in, T, N)
        # Graph mix: y[c, t, n] = sum_m x[c, t, m] * A[n, m]
        # -> ONE matmul, layout-wise (C_in*T, N) @ (N, N); contraction over the
        #    lane (node) axis, no per-(b,t) batching.
        y = lax.dot_general(
            x, at, (((2,), (0,)), ((), ())),
            preferred_element_type=jnp.float32)          # (C_in, T, N)
        # 1x1 conv / channel mix: out[o, t, n] = sum_c W[o, c] * y[c, t, n]
        # -> ONE matmul, layout-wise (C_out, C_in) @ (C_in, T*N); output free
        #    dims are the full (T, N) slab (lane axis = N).
        out = lax.dot_general(
            w, y, (((1,), (0,)), ((), ())),
            preferred_element_type=jnp.float32)          # (C_out, T, N)
        o_ref[i] = out.astype(o_ref.dtype)


def _batches_per_step(B, bytes_per_batch, target_bytes=1 << 20):
    """Largest divisor of B such that each grid step moves roughly
    `target_bytes` of input while leaving >= 2 grid steps whenever B >= 2
    (keeps both v7x TensorCores busy; free on single-TC v5e/v6e)."""
    want = max(1, target_bytes // max(1, bytes_per_batch))
    want = min(want, max(1, B // 2))
    bb = 1
    for d in range(1, int(want) + 1):
        if B % d == 0:
            bb = d
    return bb


def graph_conv(x, A, W):
    """x: (B, C_in, T, N), A: (N, N), W: (C_out, C_in, 1, 1) -> (B, C_out, T, N)."""
    B, C_in, T, N = x.shape
    C_out = W.shape[0]

    # Tiny one-time weight prep only (no activation-sized HBM round trips).
    at = jnp.transpose(A.astype(x.dtype))          # (N, N) = A^T
    w2d = W.reshape(C_out, C_in).astype(x.dtype)   # (C_out, C_in)

    itemsize = jnp.dtype(x.dtype).itemsize
    bb = _batches_per_step(B, C_in * T * N * itemsize)
    grid = (B // bb,)

    flops = 2 * B * T * N * (C_in * N + C_out * C_in)
    bytes_accessed = (x.size + at.size + w2d.size + B * C_out * T * N) * itemsize

    return pl.pallas_call(
        graph_conv_kernel,
        out_shape=jax.ShapeDtypeStruct((B, C_out, T, N), x.dtype),
        grid_spec=pltpu.PrefetchScalarGridSpec(
            num_scalar_prefetch=0,
            grid=grid,
            in_specs=[
                pl.BlockSpec((bb, C_in, T, N), lambda b: (b, 0, 0, 0)),
                pl.BlockSpec((N, N), lambda b: (0, 0)),        # resident (index fixed)
                pl.BlockSpec((C_out, C_in), lambda b: (0, 0)),  # resident (index fixed)
            ],
            out_specs=pl.BlockSpec((bb, C_out, T, N), lambda b: (b, 0, 0, 0)),
        ),
        compiler_params=pltpu.CompilerParams(
            dimension_semantics=("parallel",)),
        cost_estimate=pl.CostEstimate(
            flops=flops, transcendentals=0, bytes_accessed=bytes_accessed),
    )(x, at, w2d)


if __name__ == "__main__":

    def run_check(B, C_in, T, N, C_out):
        key = jax.random.PRNGKey(0)
        k_x, k_a, k_w = jax.random.split(key, 3)

        x = jax.random.normal(k_x, (B, C_in, T, N), dtype=jnp.float32)

        # Deterministic synthetic adjacency: symmetric, row-normalized.
        A_raw = jax.random.uniform(k_a, (N, N), dtype=jnp.float32)
        A_sym = 0.5 * (A_raw + A_raw.T) + jnp.eye(N, dtype=jnp.float32)
        A = A_sym / jnp.sum(A_sym, axis=1, keepdims=True)

        # Kaiming-normal init for the 1x1 conv weight (fan_in = C_in).
        W = jax.random.normal(k_w, (C_out, C_in, 1, 1), dtype=jnp.float32) * jnp.sqrt(
            2.0 / C_in)

        out = jax.block_until_ready(graph_conv(x, A, W))

        # Reference: exactly the PyTorch forward math, in plain JAX.
        x_perm = jnp.transpose(x, (0, 2, 3, 1))                 # (B, T, N, C_in)
        x_gc = jnp.einsum("nm,btmc->btnc", A, x_perm)           # (B, T, N, C_in)
        ref = jnp.einsum("btnc,oc->botn", x_gc, W.reshape(C_out, C_in))

        assert out.shape == (B, C_out, T, N)
        err = float(jnp.max(jnp.abs(out - ref)))
        assert jnp.allclose(out, ref, atol=1e-4, rtol=1e-4), err

    # Small shapes consistent with the module (B, C_in, T, N) / C_out.
    run_check(B=2, C_in=4, T=8, N=16, C_out=8)     # bb=1 -> grid=(2,)
    run_check(B=4, C_in=8, T=12, N=24, C_out=16)   # bb=2 -> grid=(2,), STGCN's T=12, unaligned N

    print("KERNEL_OK")
</pallas_src>

<mosaic_0001>
module attributes {stable_mosaic.version = 11 : i64} {
  func.func @graph_conv_kernel(%arg0: i32, %arg1: memref<1x4x8x16xf32, #tpu.memory_space<vmem>>, %arg2: memref<16x16xf32, #tpu.memory_space<vmem>>, %arg3: memref<8x4xf32, #tpu.memory_space<vmem>>, %arg4: memref<1x8x8x16xf32, #tpu.memory_space<vmem>>) attributes {dimension_semantics = [#tpu.dimension_semantics<parallel>], iteration_bounds = array<i64: 2>, scalar_prefetch = 0 : i64, scratch_operands = 0 : i64, tpu.core_type = #tpu.core_type<tc>, window_params = [{transform_indices = @transform_0, window_bounds = array<i64: 1, 4, 8, 16>}, {pipeline_mode = #tpu.pipeline_mode<synchronous>, transform_indices = @transform_1, window_bounds = array<i64: 16, 16>}, {pipeline_mode = #tpu.pipeline_mode<synchronous>, transform_indices = @transform_2, window_bounds = array<i64: 8, 4>}, {transform_indices = @transform_3, window_bounds = array<i64: 1, 8, 8, 16>}]} {
    %c0 = arith.constant 0 : index
    %c0_0 = arith.constant 0 : index
    %0 = vector.load %arg2[%c0, %c0_0] : memref<16x16xf32, #tpu.memory_space<vmem>>, vector<16x16xf32>
    %c0_1 = arith.constant 0 : index
    %c0_2 = arith.constant 0 : index
    %1 = vector.load %arg3[%c0_1, %c0_2] : memref<8x4xf32, #tpu.memory_space<vmem>>, vector<8x4xf32>
    %c0_3 = arith.constant 0 : index
    %c0_4 = arith.constant 0 : index
    %c0_5 = arith.constant 0 : index
    %c0_6 = arith.constant 0 : index
    %2 = vector.load %arg1[%c0_3, %c0_4, %c0_5, %c0_6] : memref<1x4x8x16xf32, #tpu.memory_space<vmem>>, vector<1x4x8x16xf32>
    %3 = vector.shape_cast %2 : vector<1x4x8x16xf32> to vector<4x8x16xf32>
    %cst = arith.constant dense<0.000000e+00> : vector<4x8x16xf32>
    %4 = tpu.matmul %3, %0, %cst {dimension_numbers = #tpu.dot_dimension_numbers<[2], [0], [0, 1], [1], [0, 0, 0, 1, 1, 1], [], []>} : vector<4x8x16xf32>, vector<16x16xf32>, vector<4x8x16xf32> -> vector<4x8x16xf32>
    %cst_7 = arith.constant dense<0.000000e+00> : vector<8x8x16xf32>
    %5 = tpu.matmul %1, %4, %cst_7 {dimension_numbers = #tpu.dot_dimension_numbers<[1], [0], [0], [1, 2], [0, 0, 1, 1, 1, 2], [], []>} : vector<8x4xf32>, vector<4x8x16xf32>, vector<8x8x16xf32> -> vector<8x8x16xf32>
    %c0_8 = arith.constant 0 : index
    %c0_9 = arith.constant 0 : index
    %c0_10 = arith.constant 0 : index
    %c0_11 = arith.constant 0 : index
    %6 = vector.load %arg4[%c0_8, %c0_9, %c0_10, %c0_11] : memref<1x8x8x16xf32, #tpu.memory_space<vmem>>, vector<1x8x8x16xf32>
    %7 = vector.shape_cast %6 : vector<1x8x8x16xf32> to vector<8x8x16xf32>
    %8 = vector.shape_cast %5 : vector<8x8x16xf32> to vector<1x8x8x16xf32>
    tpu.vector_store %arg4[%c0_8, %c0_9, %c0_10, %c0_11], %8 {strides = array<i32>} : memref<1x8x8x16xf32, #tpu.memory_space<vmem>>, vector<1x8x8x16xf32>,
    return
  }
  func.func @transform_0(%arg0: i32) -> (i32, i32, i32, i32) {
    %c0_i32 = arith.constant 0 : i32
    %c0_i32_0 = arith.constant 0 : i32
    %c0_i32_1 = arith.constant 0 : i32
    %c0_i32_2 = arith.constant 0 : i32
    return %arg0, %c0_i32, %c0_i32_0, %c0_i32_1 : i32, i32, i32, i32
  }
  func.func @transform_1(%arg0: i32) -> (i32, i32) {
    %c0_i32 = arith.constant 0 : i32
    %c0_i32_0 = arith.constant 0 : i32
    %c0_i32_1 = arith.constant 0 : i32
    return %c0_i32, %c0_i32_0 : i32, i32
  }
  func.func @transform_2(%arg0: i32) -> (i32, i32) {
    %c0_i32 = arith.constant 0 : i32
    %c0_i32_0 = arith.constant 0 : i32
    %c0_i32_1 = arith.constant 0 : i32
    return %c0_i32, %c0_i32_0 : i32, i32
  }
  func.func @transform_3(%arg0: i32) -> (i32, i32, i32, i32) {
    %c0_i32 = arith.constant 0 : i32
    %c0_i32_0 = arith.constant 0 : i32
    %c0_i32_1 = arith.constant 0 : i32
    %c0_i32_2 = arith.constant 0 : i32
    return %arg0, %c0_i32, %c0_i32_0, %c0_i32_1 : i32, i32, i32, i32
  }
}

</mosaic_0001>

<llo_original>
// kernel: tpu_custom_call.1
$region0: #{tpu_custom_call.1}
  #allocation0 [shape = 'u32[]', space=smem, size = 0x4, offset = 0x4, fixed_abs, tag = 'smem constant byte address 0x4 - core index']
  #allocation1 [shape = 'u32[144,128]{1,0:T(1,128)}', space=vmem, size = 0x12000, scoped, tag = 'internal scratch']
  %s0 = inlined_call_operand.hbm [shape: f32[2,4,8,16], index: 0, kind: input, shape index: {}]
  %s1 = inlined_call_operand.hbm [shape: f32[16,16], index: 1, kind: input, shape index: {}]
  %s2 = inlined_call_operand.vmem [shape: f32[8,4], index: 2, kind: input, shape index: {}]
  %s3 = inlined_call_operand.hbm [shape: f32[2,8,8,16], index: 3, kind: output, shape index: {}]
  %s4 = sld [smem:[#allocation0]]
  $region53: #{tpu_custom_call.1} parent=0
    _
  %s6 = ssub.s32 1, %s4
  %s7 = scalar_select 0, %s6, %s4
  $region1: #{tpu_custom_call.1} parent=0
    #allocation2 [shape = 'u8[32768]{0}', space=vmem, size = 0x8000, scoped, tag = 'input window, operand 0']
    #allocation3 [shape = 's32[2]{0}', space=sflag, size = 0x8, scoped, tag = 'scoped memory for tpu_custom_call.1']
    #allocation4 [shape = 's32[2]{0}', space=sflag, size = 0x8, scoped, tag = 'scoped memory for tpu_custom_call.1']
    #allocation5 [shape = 'u8[8192]{0}', space=vmem, size = 0x2000, scoped, tag = 'input window, operand 1, single buffered']
    #allocation6 [shape = 's32[1]{0}', space=sflag, size = 0x4, scoped, tag = 'scoped memory for tpu_custom_call.1']
    #allocation7 [shape = 'u8[65536]{0}', space=vmem, size = 0x10000, scoped, tag = 'output window, operand 0']
    %8 = vsyncpa [#allocation3], 0
    %s9 = scalar_lea.sflag [#allocation3], 1
    %10 = vsyncpa %s9, 0
    %11 = vsyncpa [#allocation6], 0
    %12 = vsyncpa [#allocation4], 0
    %s13 = scalar_lea.sflag [#allocation4], 1
    %14 = vsyncpa %s13, 0
    loop: start=0, step=1, limit=4
    $region2: #{tpu_custom_call.1} parent=1 // loop_pre_header
      _
    $region3: #{tpu_custom_call.1} parent=1 // loop_header
      %s16 = sphi 0, %s20
      %p17 = scmp.ge.s32.totalorder %s16, 4
      %s26 = sphi 0, %s28
      %s29 = sphi 0, %s26
      %s30 = sphi 0, %s29
      %s46 = sphi 0, %s30
      %s50 = sphi 0, %s50
      %s52 = sphi 0, %s50
      %s53 = sphi 0, %s52
      %s67 = sphi 0, %s53
      %s71 = sphi 0, %s71
      %s73 = sphi 0, %s71
      %s74 = sphi 0, %s73
      %s88 = sphi 0, %s74
      %s94 = sphi 0, %s96
      %s97 = sphi 0, %s94
      %s98 = sphi 0, %s97
      %s114 = sphi 0, %s98
    $region4: #{tpu_custom_call.1} parent=1 // loop_header_branch
      %19 = sbr.rel (%p17) target = $region8
    $region5: #{tpu_custom_call.1} parent=1 // loop_body
      %s21 = ssub.s32 %s16, 1
      %s22 = ssub.s32 %s16, 2
      %s23 = sadd.s32 %s16, 1
      %s24 = ssub.s32 %s16, %s23
      %p25 = scmp.eq.s32.totalorder %s24, 0
      %s27 = sadd.s32 %s26, 1
      %s28 = scalar_select %p25, %s26, %s27
      %p31 = pneg %p25
      %p32 = scmp.eq.s32.totalorder %s16, 1
      %p33 = por %p31, %p32
      %p34 = scmp.ne.s32.totalorder %s26, %s29
      %p35 = scmp.eq.s32.totalorder %s16, 0
      %p36 = por %p34, %p35
      %p37 = scmp.ne.s32.totalorder %s26, %s29
      %p38 = scmp.eq.s32.totalorder %s21, 1
      %p39 = por %p37, %p38
      %p40 = scmp.ne.s32.totalorder %s29, %s30
      %p41 = scmp.eq.s32.totalorder %s21, 0
      %p42 = por %p40, %p41
      %p43 = scmp.ne.s32.totalorder %s29, %s30
      %p44 = scmp.eq.s32.totalorder %s22, 1
      %p45 = por %p43, %p44
      %p47 = scmp.ne.s32.totalorder %s30, %s46
      %p48 = scmp.eq.s32.totalorder %s22, 0
      %p49 = por %p47, %p48
      %s51 = sadd.s32 %s50, 1
      %p54 = scmp.eq.s32.totalorder %s16, 1
      %p55 = scmp.ne.s32.totalorder %s50, %s52
      %p56 = scmp.eq.s32.totalorder %s16, 0
      %p57 = por %p55, %p56
      %p58 = scmp.ne.s32.totalorder %s50, %s52
      %p59 = scmp.eq.s32.totalorder %s21, 1
      %p60 = por %p58, %p59
      %p61 = scmp.ne.s32.totalorder %s52, %s53
      %p62 = scmp.eq.s32.totalorder %s21, 0
      %p63 = por %p61, %p62
      %p64 = scmp.ne.s32.totalorder %s52, %s53
      %p65 = scmp.eq.s32.totalorder %s22, 1
      %p66 = por %p64, %p65
      %p68 = scmp.ne.s32.totalorder %s53, %s67
      %p69 = scmp.eq.s32.totalorder %s22, 0
      %p70 = por %p68, %p69
      %s72 = sadd.s32 %s71, 1
      %p75 = scmp.eq.s32.totalorder %s16, 1
      %p76 = scmp.ne.s32.totalorder %s71, %s73
      %p77 = scmp.eq.s32.totalorder %s16, 0
      %p78 = por %p76, %p77
      %p79 = scmp.ne.s32.totalorder %s71, %s73
      %p80 = scmp.eq.s32.totalorder %s21, 1
      %p81 = por %p79, %p80
      %p82 = scmp.ne.s32.totalorder %s73, %s74
      %p83 = scmp.eq.s32.totalorder %s21, 0
      %p84 = por %p82, %p83
      %p85 = scmp.ne.s32.totalorder %s73, %s74
      %p86 = scmp.eq.s32.totalorder %s22, 1
      %p87 = por %p85, %p86
      %p89 = scmp.ne.s32.totalorder %s74, %s88
      %p90 = scmp.eq.s32.totalorder %s22, 0
      %p91 = por %p89, %p90
      %s92 = ssub.s32 %s16, %s23
      %p93 = scmp.eq.s32.totalorder %s92, 0
      %s95 = sadd.s32 %s94, 1
      %s96 = scalar_select %p93, %s94, %s95
      %p99 = pneg %p93
      %p100 = scmp.eq.s32.totalorder %s16, 1
      %p101 = por %p99, %p100
      %p102 = scmp.ne.s32.totalorder %s94, %s97
      %p103 = scmp.eq.s32.totalorder %s16, 0
      %p104 = por %p102, %p103
      %p105 = scmp.ne.s32.totalorder %s94, %s97
      %p106 = scmp.eq.s32.totalorder %s21, 1
      %p107 = por %p105, %p106
      %p108 = scmp.ne.s32.totalorder %s97, %s98
      %p109 = scmp.eq.s32.totalorder %s21, 0
      %p110 = por %p108, %p109
      %p111 = scmp.ne.s32.totalorder %s97, %s98
      %p112 = scmp.eq.s32.totalorder %s22, 1
      %p113 = por %p111, %p112
      %p115 = scmp.ne.s32.totalorder %s98, %s114
      %p116 = scmp.eq.s32.totalorder %s22, 0
      %p117 = por %p115, %p116
      %p118 = scmp.le.s32.totalorder 1, %s16
      %p119 = scmp.lt.s32.totalorder %s16, 3
      %p120 = pnand %p118, %p119
      %p121 = pneg %p120
      // Predicated region
      $region9: #{tpu_custom_call.1} parent=5 // pred_check
        _
      $region10: #{tpu_custom_call.1} parent=5 // pred_check_branch
        %123 = sbr.rel (%p120) target = $region12
      $region11: #{tpu_custom_call.1} parent=5 // pred_region
        %s124 = ssub.s32 %s16, 1
        // Predicated region
        $region13: #{tpu_custom_call.1} parent=11 // pred_check
          %p125 = pneg %p63
        $region14: #{tpu_custom_call.1} parent=11 // pred_check_branch
          %127 = sbr.rel (%p125) target = $region16
        $region15: #{tpu_custom_call.1} parent=11 // pred_region
          %s129 = ssub.s32 256, 256
          %130 = vsyncadd [#allocation6], %s129
          %s131 = sshll.u32 [#allocation5], 4
          %s132 = int_to_ptr.vmem [resolvable:$true] %s131
          %137 = dma.hbm_to_vmem [thread:$0]  %s1, 256, %s132, [#allocation6], 128, 128, 8
        $region16: #{tpu_custom_call.1} parent=11 // pred_fallthru
          _
        // Predicated region
        $region17: #{tpu_custom_call.1} parent=11 // pred_check
          %p138 = pneg %p84
        $region18: #{tpu_custom_call.1} parent=11 // pred_check_branch
          %140 = sbr.rel (%p138) target = $region20
        $region19: #{tpu_custom_call.1} parent=11 // pred_region
          _
        $region20: #{tpu_custom_call.1} parent=11 // pred_fallthru
          _
      $region12: #{tpu_custom_call.1} parent=5 // pred_fallthru
        _
      %p141 = scmp.lt.s32.totalorder %s16, 2
      // Predicated region
      $region21: #{tpu_custom_call.1} parent=5 // pred_check
        %p142 = pneg %p141
      $region22: #{tpu_custom_call.1} parent=5 // pred_check_branch
        %144 = sbr.rel (%p142) target = $region24
      $region23: #{tpu_custom_call.1} parent=5 // pred_region
        // Predicated region
        $region25: #{tpu_custom_call.1} parent=23 // pred_check
          %p145 = pneg %p36
        $region26: #{tpu_custom_call.1} parent=23 // pred_check_branch
          %147 = sbr.rel (%p145) target = $region28
        $region27: #{tpu_custom_call.1} parent=23 // pred_region
          %s148 = sand.u32 %s26, 1
          %s149 = scalar_lea.sflag [#allocation3], %s148
          %s150 = sand.u32 %s26, 1
          %s151 = smul.addr %s150, 32
          %s152 = scalar_lea.vmem [#allocation2], %s151
          %s154 = ssub.s32 512, 512
          %155 = vsyncadd %s149, %s154
          %s156 = smul.addr %s16, 4
          %s157 = smul.addr %s156, 128
          %s158 = scalar_lea.hbm %s0, %s157
          %s159 = sshll.u32 %s152, 4
          %s160 = int_to_ptr.vmem [resolvable:$true] %s159
          %165 = dma.hbm_to_vmem [thread:$0]  %s158, 512, %s160, %s149, 128, 128, 8
        $region28: #{tpu_custom_call.1} parent=23 // pred_fallthru
          _
      $region24: #{tpu_custom_call.1} parent=5 // pred_fallthru
        _
      %p166 = scmp.le.s32.totalorder 1, %s16
      %p167 = scmp.lt.s32.totalorder %s16, 3
      %p168 = pnand %p166, %p167
      %p169 = pneg %p168
      // Predicated region
      $region29: #{tpu_custom_call.1} parent=5 // pred_check
        _
      $region30: #{tpu_custom_call.1} parent=5 // pred_check_branch
        %171 = sbr.rel (%p168) target = $region32
      $region31: #{tpu_custom_call.1} parent=5 // pred_region
        %s172 = ssub.s32 %s16, 1
        %s173 = sand.u32 %s29, 1
        %s174 = scalar_lea.sflag [#allocation3], %s173
        %s175 = sand.u32 %s29, 1
        %s176 = smul.addr %s175, 32
        %s177 = scalar_lea.vmem [#allocation2], %s176
        // Predicated region
        $region33: #{tpu_custom_call.1} parent=31 // pred_check
          %p178 = pneg %p42
        $region34: #{tpu_custom_call.1} parent=31 // pred_check_branch
          %180 = sbr.rel (%p178) target = $region36
        $region35: #{tpu_custom_call.1} parent=31 // pred_region
          %181 = dma.done %s174, 512
        $region36: #{tpu_custom_call.1} parent=31 // pred_fallthru
          _
        // Predicated region
        $region37: #{tpu_custom_call.1} parent=31 // pred_check
          %p182 = pneg %p63
        $region38: #{tpu_custom_call.1} parent=31 // pred_check_branch
          %184 = sbr.rel (%p182) target = $region40
        $region39: #{tpu_custom_call.1} parent=31 // pred_region
          %185 = dma.done [#allocation6], 256
        $region40: #{tpu_custom_call.1} parent=31 // pred_fallthru
          _
        %s186 = sand.u32 %s29, 1
        %s187 = scalar_lea.sflag [#allocation3], %s186
        %s188 = sand.u32 %s29, 1
        %s189 = smul.addr %s188, 32
        %s190 = scalar_lea.vmem [#allocation2], %s189
        %p191 = pneg %p42
        %p192 = pneg %p39
        %p193 = pneg %p63
        %p194 = pneg %p60
        %p195 = pneg %p84
        %p196 = pneg %p81
        %p197 = pneg %p110
        %p198 = pneg %p107
        %s199 = sand.u32 %s97, 1
        %s200 = scalar_lea.sflag [#allocation4], %s199
        %s201 = sand.u32 %s97, 1
        %s202 = smul.addr %s201, 64
        %s203 = scalar_lea.vmem [#allocation7], %s202
        %v204 = vld [vmem:[#allocation5] sm:$0xff]
        %v205 = vld [vmem:[#allocation5 + $0x8] sm:$0xff]
        %v206 = vld [vmem:[%s2] sm:$0xff]
        %v207 = vld [vmem:[%s177] sm:$0xff]
        %v208 = vld [vmem:[%s177 + $0x8] sm:$0xff]
        %v209 = vld [vmem:[%s177 + $0x10] sm:$0xff]
        %v210 = vld [vmem:[%s177 + $0x18] sm:$0xff]
        %vm211 = vcmask 130048
        %v213 = vsel %vm211, %v207, 0
        %v216 = vsel %vm211, %v208, 0
        %v219 = vsel %vm211, %v209, 0
        %v222 = vsel %vm211, %v210, 0
        %224 = vmatprep.subr.mxu0 0.0
        %225 = vmatpush1.msra.mxu0 0.0
        %226 = vmatprep.subr.mxu0 0.0
        %227 = vmatpush1.msra.mxu0 0.0
        %228 = vmatprep.subr.mxu0 0.0
        %229 = vmatpush1.msra.mxu0 0.0
        %230 = vmatprep.subr.mxu0 0.0
        %231 = vmatpush1.msra.mxu0 0.0
        %232 = vmatprep.subr.mxu0 0.0
        %233 = vmatpush1.msra.mxu0 0.0
        %234 = vmatprep.subr.mxu0 0.0
        %235 = vmatpush1.msra.mxu0 0.0
        %236 = vmatprep.subr.mxu0 0.0
        %237 = vmatpush1.msra.mxu0 0.0
        %238 = vmatprep.subr.mxu0 0.0
        %239 = vmatpush1.msra.mxu0 0.0
        %240 = vmatprep.subr.mxu0 0.0
        %241 = vmatpush1.msra.mxu0 0.0
        %242 = vmatprep.subr.mxu0 0.0
        %243 = vmatpush1.msra.mxu0 0.0
        %244 = vmatprep.subr.mxu0 0.0
        %245 = vmatpush1.msra.mxu0 0.0
        %246 = vmatprep.subr.mxu0 0.0
        %247 = vmatpush1.msra.mxu0 0.0
        %248 = vmatprep.subr.mxu0 0.0
        %249 = vmatpush1.msra.mxu0 0.0
        %250 = vmatprep.subr.mxu0 0.0
        %251 = vmatpush1.msra.mxu0 0.0
        %252 = vmatprep.subr.mxu0 0.0
        %253 = vmatpush1.msra.mxu0 %v205
        %254 = vmatprep.subr.mxu0 0.0
        %255 = vmatpush1.msra.mxu0 %v204
        %256 = vmatprep.subr.mxu0 0.0
        %257 = vmatpush2.msra.mxu0 0.0
        %258 = vmatprep.subr.mxu0 0.0
        %259 = vmatpush2.msra.mxu0 0.0
        %260 = vmatprep.subr.mxu0 0.0
        %261 = vmatpush2.msra.mxu0 0.0
        %262 = vmatprep.subr.mxu0 0.0
        %263 = vmatpush2.msra.mxu0 0.0
        %264 = vmatprep.subr.mxu0 0.0
        %265 = vmatpush2.msra.mxu0 0.0
        %266 = vmatprep.subr.mxu0 0.0
        %267 = vmatpush2.msra.mxu0 0.0
        %268 = vmatprep.subr.mxu0 0.0
        %269 = vmatpush2.msra.mxu0 0.0
        %270 = vmatprep.subr.mxu0 0.0
        %271 = vmatpush2.msra.mxu0 0.0
        %272 = vmatprep.subr.mxu0 0.0
        %273 = vmatpush2.msra.mxu0 0.0
        %274 = vmatprep.subr.mxu0 0.0
        %275 = vmatpush2.msra.mxu0 0.0
        %276 = vmatprep.subr.mxu0 0.0
        %277 = vmatpush2.msra.mxu0 0.0
        %278 = vmatprep.subr.mxu0 0.0
        %279 = vmatpush2.msra.mxu0 0.0
        %280 = vmatprep.subr.mxu0 0.0
        %281 = vmatpush2.msra.mxu0 0.0
        %282 = vmatprep.subr.mxu0 0.0
        %283 = vmatpush2.msra.mxu0 0.0
        %284 = vmatprep.subr.mxu0 0.0
        %285 = vmatpush2.msra.mxu0 0.0
        %286 = vmatprep.subr.mxu0 0.0
        %287 = vmatpush2.msra.mxu0 0.0
        %288 = vmatprep.mubr.f32.mxu0 0.0
        %289 = vmatmul.mubr.f32.gmra.mxu0 %v213
        %v290 = vpop.f32.mrf.mxu0
        %v291 = vadd.f32 0.0, %v290
        %v292 = vpop.f32.mrf.mxu0
        %293 = vmatprep.mubr.f32.mxu0 0.0
        %294 = vmatmul.mubr.f32.gmra.mxu0 %v216
        %v295 = vpop.f32.mrf.mxu0
        %v296 = vadd.f32 0.0, %v295
        %v297 = vpop.f32.mrf.mxu0
        %298 = vmatprep.mubr.f32.mxu0 0.0
        %299 = vmatmul.mubr.f32.gmra.mxu0 %v219
        %v300 = vpop.f32.mrf.mxu0
        %v301 = vadd.f32 0.0, %v300
        %v302 = vpop.f32.mrf.mxu0
        %303 = vmatprep.mubr.f32.mxu0 0.0
        %304 = vmatmul.mubr.f32.gmra.mxu0 %v222
        %v305 = vpop.f32.mrf.mxu0
        %v306 = vadd.f32 0.0, %v305
        %v307 = vpop.f32.mrf.mxu0
        %308 = vdwg.mxu0
        %v309 = vcombine.low %v291, %v301
        %v310 = vcombine.high %v291, %v301
        %v312 = vunpack.c.l.s4 1983009808
        %v313 = vunpack.c.0.s8 %v312
        %v314 = vlaneseq
        %v315 = vshrl.u32 %v314, 7
        %v316 = vsub.s32 %v313, %v315
        %v317 = vrot.slane %v309, %v316
        %v319 = vunpack.c.l.s4 1983009808
        %v320 = vunpack.c.0.s8 %v319
        %v321 = vlaneseq
        %v322 = vshrl.u32 %v321, 7
        %v323 = vsub.s32 %v320, %v322
        %v324 = vrot.slane %v310, %v323
        %v325 = vcombine.low %v296, %v306
        %v326 = vcombine.high %v296, %v306
        %v328 = vunpack.c.l.s4 1983009808
        %v329 = vunpack.c.0.s8 %v328
        %v330 = vlaneseq
        %v331 = vshrl.u32 %v330, 7
        %v332 = vsub.s32 %v329, %v331
        %v333 = vrot.slane %v325, %v332
        %v335 = vunpack.c.l.s4 1983009808
        %v336 = vunpack.c.0.s8 %v335
        %v337 = vlaneseq
        %v338 = vshrl.u32 %v337, 7
        %v339 = vsub.s32 %v336, %v338
        %v340 = vrot.slane %v326, %v339
        %v341 = vcombine.low %v317, %v333
        %v342 = vcombine.high %v317, %v333
        %v344 = vunpack.c.l.s4 1934713408
        %v345 = vunpack.c.0.s8 %v344
        %v346 = vlaneseq
        %v347 = vshrl.u32 %v346, 7
        %v348 = vsub.s32 %v345, %v347
        %v349 = vrot.slane %v341, %v348
        %v351 = vunpack.c.l.s4 1934713408
        %v352 = vunpack.c.0.s8 %v351
        %v353 = vlaneseq
        %v354 = vshrl.u32 %v353, 7
        %v355 = vsub.s32 %v352, %v354
        %v356 = vrot.slane %v342, %v355
        %v357 = vcombine.low %v324, %v340
        %v358 = vcombine.high %v324, %v340
        %v360 = vunpack.c.l.s4 1934713408
        %v361 = vunpack.c.0.s8 %v360
        %v362 = vlaneseq
        %v363 = vshrl.u32 %v362, 7
        %v364 = vsub.s32 %v361, %v363
        %v365 = vrot.slane %v357, %v364
        %v367 = vunpack.c.l.s4 1934713408
        %v368 = vunpack.c.0.s8 %v367
        %v369 = vlaneseq
        %v370 = vshrl.u32 %v369, 7
        %v371 = vsub.s32 %v368, %v370
        %v372 = vrot.slane %v358, %v371
        %v373 = vcombine.high %v349, 0.0
        %v374 = vcombine.high %v356, 0.0
        %v375 = vcombine.high %v365, 0.0
        %v376 = vcombine.high %v372, 0.0
        %378 = vrot.lane.b32.xlu0 %v373, 16
        %v379 = vpop.permute.xlu0 %378
        %382 = vrot.lane.b32.xlu0 %v356, 32
        %v383 = vpop.permute.xlu0 %382
        %386 = vrot.lane.b32.xlu0 %v374, 48
        %v387 = vpop.permute.xlu0 %386
        %390 = vrot.lane.b32.xlu0 %v365, 64
        %v391 = vpop.permute.xlu0 %390
        %394 = vrot.lane.b32.xlu0 %v375, 80
        %v395 = vpop.permute.xlu0 %394
        %398 = vrot.lane.b32.xlu0 %v372, 96
        %v399 = vpop.permute.xlu0 %398
        %402 = vrot.lane.b32.xlu0 %v376, 112
        %v403 = vpop.permute.xlu0 %402
        %v405 = vsel %vm211, %v349, %v379
        %vm406 = vcmask 261120
        %v407 = vsel %vm406, %v405, %v383
        %vm408 = vcmask 392192
        %v409 = vsel %vm408, %v407, %v387
        %vm410 = vcmask 523264
        %v411 = vsel %vm410, %v409, %v391
        %vm412 = vcmask 654336
        %v413 = vsel %vm412, %v411, %v395
        %vm414 = vcmask 785408
        %v415 = vsel %vm414, %v413, %v399
        %vm416 = vcmask 916480
        %v417 = vsel %vm416, %v415, %v403
        %v418 = vcombine.low 0.0, 0.0
        %v419 = vcombine.high 0.0, 0.0
        %v421 = vunpack.c.l.s4 1983009808
        %v422 = vunpack.c.0.s8 %v421
        %v423 = vlaneseq
        %v424 = vshrl.u32 %v423, 7
        %v425 = vsub.s32 %v422, %v424
        %v426 = vrot.slane %v418, %v425
        %v428 = vunpack.c.l.s4 1983009808
        %v429 = vunpack.c.0.s8 %v428
        %v430 = vlaneseq
        %v431 = vshrl.u32 %v430, 7
        %v432 = vsub.s32 %v429, %v431
        %v433 = vrot.slane %v419, %v432
        %v434 = vcombine.low %v426, %v426
        %v435 = vcombine.high %v426, %v426
        %v437 = vunpack.c.l.s4 1934713408
        %v438 = vunpack.c.0.s8 %v437
        %v439 = vlaneseq
        %v440 = vshrl.u32 %v439, 7
        %v441 = vsub.s32 %v438, %v440
        %v442 = vrot.slane %v434, %v441
        %v444 = vunpack.c.l.s4 1934713408
        %v445 = vunpack.c.0.s8 %v444
        %v446 = vlaneseq
        %v447 = vshrl.u32 %v446, 7
        %v448 = vsub.s32 %v445, %v447
        %v449 = vrot.slane %v435, %v448
        %v450 = vcombine.low %v433, %v433
        %v451 = vcombine.high %v433, %v433
        %v453 = vunpack.c.l.s4 1934713408
        %v454 = vunpack.c.0.s8 %v453
        %v455 = vlaneseq
        %v456 = vshrl.u32 %v455, 7
        %v457 = vsub.s32 %v454, %v456
        %v458 = vrot.slane %v450, %v457
        %v460 = vunpack.c.l.s4 1934713408
        %v461 = vunpack.c.0.s8 %v460
        %v462 = vlaneseq
        %v463 = vshrl.u32 %v462, 7
        %v464 = vsub.s32 %v461, %v463
        %v465 = vrot.slane %v451, %v464
        %v466 = vcombine.low %v442, %v442
        %v467 = vcombine.high %v442, %v442
        %v468 = vcombine.low %v449, %v449
        %v469 = vcombine.high %v449, %v449
        %v470 = vcombine.low %v458, %v458
        %v471 = vcombine.high %v458, %v458
        %v472 = vcombine.low %v465, %v465
        %v473 = vcombine.high %v465, %v465
        %475 = vrot.lane.b32.xlu0 %v467, 16
        %v476 = vpop.permute.xlu0 %475
        %479 = vrot.lane.b32.xlu0 %v468, 32
        %v480 = vpop.permute.xlu0 %479
        %483 = vrot.lane.b32.xlu0 %v469, 48
        %v484 = vpop.permute.xlu0 %483
        %487 = vrot.lane.b32.xlu0 %v470, 64
        %v488 = vpop.permute.xlu0 %487
        %491 = vrot.lane.b32.xlu0 %v471, 80
        %v492 = vpop.permute.xlu0 %491
        %495 = vrot.lane.b32.xlu0 %v472, 96
        %v496 = vpop.permute.xlu0 %495
        %499 = vrot.lane.b32.xlu0 %v473, 112
        %v500 = vpop.permute.xlu0 %499
        %v502 = vsel %vm211, %v466, %v476
        %v503 = vsel %vm406, %v502, %v480
        %v504 = vsel %vm408, %v503, %v484
        %v505 = vsel %vm410, %v504, %v488
        %v506 = vsel %vm412, %v505, %v492
        %v507 = vsel %vm414, %v506, %v496
        %v508 = vsel %vm416, %v507, %v500
        %vm509 = vcmask 31744
        %v511 = vsel %vm509, %v206, 0
        %vm513 = vcmask 1043456
        %v515 = vsel %vm513, %v417, 0
        %517 = vmatprep.subr.mxu0 0.0
        %518 = vmatpush1.msra.mxu0 0.0
        %519 = vmatprep.subr.mxu0 0.0
        %520 = vmatpush1.msra.mxu0 0.0
        %521 = vmatprep.subr.mxu0 0.0
        %522 = vmatpush1.msra.mxu0 0.0
        %523 = vmatprep.subr.mxu0 0.0
        %524 = vmatpush1.msra.mxu0 0.0
        %525 = vmatprep.subr.mxu0 0.0
        %526 = vmatpush1.msra.mxu0 0.0
        %527 = vmatprep.subr.mxu0 0.0
        %528 = vmatpush1.msra.mxu0 0.0
        %529 = vmatprep.subr.mxu0 0.0
        %530 = vmatpush1.msra.mxu0 0.0
        %531 = vmatprep.subr.mxu0 0.0
        %532 = vmatpush1.msra.mxu0 0.0
        %533 = vmatprep.subr.mxu0 0.0
        %534 = vmatpush1.msra.mxu0 0.0
        %535 = vmatprep.subr.mxu0 0.0
        %536 = vmatpush1.msra.mxu0 0.0
        %537 = vmatprep.subr.mxu0 0.0
        %538 = vmatpush1.msra.mxu0 0.0
        %539 = vmatprep.subr.mxu0 0.0
        %540 = vmatpush1.msra.mxu0 0.0
        %541 = vmatprep.subr.mxu0 0.0
        %542 = vmatpush1.msra.mxu0 0.0
        %543 = vmatprep.subr.mxu0 0.0
        %544 = vmatpush1.msra.mxu0 0.0
        %545 = vmatprep.subr.mxu0 0.0
        %546 = vmatpush1.msra.mxu0 0.0
        %547 = vmatprep.subr.mxu0 0.0
        %548 = vmatpush1.msra.mxu0 %v515
        %549 = vmatprep.subr.mxu0 0.0
        %550 = vmatpush2.msra.mxu0 0.0
        %551 = vmatprep.subr.mxu0 0.0
        %552 = vmatpush2.msra.mxu0 0.0
        %553 = vmatprep.subr.mxu0 0.0
        %554 = vmatpush2.msra.mxu0 0.0
        %555 = vmatprep.subr.mxu0 0.0
        %556 = vmatpush2.msra.mxu0 0.0
        %557 = vmatprep.subr.mxu0 0.0
        %558 = vmatpush2.msra.mxu0 0.0
        %559 = vmatprep.subr.mxu0 0.0
        %560 = vmatpush2.msra.mxu0 0.0
        %561 = vmatprep.subr.mxu0 0.0
        %562 = vmatpush2.msra.mxu0 0.0
        %563 = vmatprep.subr.mxu0 0.0
        %564 = vmatpush2.msra.mxu0 0.0
        %565 = vmatprep.subr.mxu0 0.0
        %566 = vmatpush2.msra.mxu0 0.0
        %567 = vmatprep.subr.mxu0 0.0
        %568 = vmatpush2.msra.mxu0 0.0
        %569 = vmatprep.subr.mxu0 0.0
        %570 = vmatpush2.msra.mxu0 0.0
        %571 = vmatprep.subr.mxu0 0.0
        %572 = vmatpush2.msra.mxu0 0.0
        %573 = vmatprep.subr.mxu0 0.0
        %574 = vmatpush2.msra.mxu0 0.0
        %575 = vmatprep.subr.mxu0 0.0
        %576 = vmatpush2.msra.mxu0 0.0
        %577 = vmatprep.subr.mxu0 0.0
        %578 = vmatpush2.msra.mxu0 0.0
        %579 = vmatprep.subr.mxu0 0.0
        %580 = vmatpush2.msra.mxu0 0.0
        %581 = vmatprep.mubr.f32.mxu0 0.0
        %582 = vmatmul.mubr.f32.gmra.mxu0 %v511
        %v583 = vpop.f32.mrf.mxu0
        %v584 = vadd.f32 %v508, %v583
        %v585 = vpop.f32.mrf.mxu0
        %586 = vdwg.mxu0
        %588 = vrot.lane.b32.xlu0 %v584, 112
        %v589 = vpop.permute.xlu0 %588
        %591 = vrot.lane.b32.xlu0 %v584, 96
        %v592 = vpop.permute.xlu0 %591
        %594 = vrot.lane.b32.xlu0 %v584, 80
        %v595 = vpop.permute.xlu0 %594
        %597 = vrot.lane.b32.xlu0 %v584, 64
        %v598 = vpop.permute.xlu0 %597
        %600 = vrot.lane.b32.xlu0 %v584, 48
        %v601 = vpop.permute.xlu0 %600
        %603 = vrot.lane.b32.xlu0 %v584, 32
        %v604 = vpop.permute.xlu0 %603
        %606 = vrot.lane.b32.xlu0 %v584, 16
        %v607 = vpop.permute.xlu0 %606
        %v609 = vcombine.low %v584, %v592
        %v610 = vcombine.high %v584, %v592
        %v612 = vunpack.c.l.s4 1983009808
        %v613 = vunpack.c.0.s8 %v612
        %v614 = vlaneseq
        %v615 = vshrl.u32 %v614, 7
        %v616 = vsub.s32 %v613, %v615
        %v617 = vrot.slane %v609, %v616
        %v619 = vunpack.c.l.s4 1983009808
        %v620 = vunpack.c.0.s8 %v619
        %v621 = vlaneseq
        %v622 = vshrl.u32 %v621, 7
        %v623 = vsub.s32 %v620, %v622
        %v624 = vrot.slane %v610, %v623
        %v625 = vcombine.low %v589, %v595
        %v626 = vcombine.high %v589, %v595
        %v628 = vunpack.c.l.s4 1983009808
        %v629 = vunpack.c.0.s8 %v628
        %v630 = vlaneseq
        %v631 = vshrl.u32 %v630, 7
        %v632 = vsub.s32 %v629, %v631
        %v633 = vrot.slane %v625, %v632
        %v635 = vunpack.c.l.s4 1983009808
        %v636 = vunpack.c.0.s8 %v635
        %v637 = vlaneseq
        %v638 = vshrl.u32 %v637, 7
        %v639 = vsub.s32 %v636, %v638
        %v640 = vrot.slane %v626, %v639
        %v641 = vcombine.low %v598, %v604
        %v642 = vcombine.high %v598, %v604
        %v644 = vunpack.c.l.s4 1983009808
        %v645 = vunpack.c.0.s8 %v644
        %v646 = vlaneseq
        %v647 = vshrl.u32 %v646, 7
        %v648 = vsub.s32 %v645, %v647
        %v649 = vrot.slane %v641, %v648
        %v651 = vunpack.c.l.s4 1983009808
        %v652 = vunpack.c.0.s8 %v651
        %v653 = vlaneseq
        %v654 = vshrl.u32 %v653, 7
        %v655 = vsub.s32 %v652, %v654
        %v656 = vrot.slane %v642, %v655
        %v657 = vcombine.low %v601, %v607
        %v658 = vcombine.high %v601, %v607
        %v660 = vunpack.c.l.s4 1983009808
        %v661 = vunpack.c.0.s8 %v660
        %v662 = vlaneseq
        %v663 = vshrl.u32 %v662, 7
        %v664 = vsub.s32 %v661, %v663
        %v665 = vrot.slane %v657, %v664
        %v667 = vunpack.c.l.s4 1983009808
        %v668 = vunpack.c.0.s8 %v667
        %v669 = vlaneseq
        %v670 = vshrl.u32 %v669, 7
        %v671 = vsub.s32 %v668, %v670
        %v672 = vrot.slane %v658, %v671
        %v673 = vcombine.low %v617, %v633
        %v674 = vcombine.high %v617, %v633
        %v676 = vunpack.c.l.s4 1934713408
        %v677 = vunpack.c.0.s8 %v676
        %v678 = vlaneseq
        %v679 = vshrl.u32 %v678, 7
        %v680 = vsub.s32 %v677, %v679
        %v681 = vrot.slane %v673, %v680
        %v683 = vunpack.c.l.s4 1934713408
        %v684 = vunpack.c.0.s8 %v683
        %v685 = vlaneseq
        %v686 = vshrl.u32 %v685, 7
        %v687 = vsub.s32 %v684, %v686
        %v688 = vrot.slane %v674, %v687
        %v689 = vcombine.low %v624, %v640
        %v690 = vcombine.high %v624, %v640
        %v692 = vunpack.c.l.s4 1934713408
        %v693 = vunpack.c.0.s8 %v692
        %v694 = vlaneseq
        %v695 = vshrl.u32 %v694, 7
        %v696 = vsub.s32 %v693, %v695
        %v697 = vrot.slane %v689, %v696
        %v699 = vunpack.c.l.s4 1934713408
        %v700 = vunpack.c.0.s8 %v699
        %v701 = vlaneseq
        %v702 = vshrl.u32 %v701, 7
        %v703 = vsub.s32 %v700, %v702
        %v704 = vrot.slane %v690, %v703
        %v705 = vcombine.low %v649, %v665
        %v706 = vcombine.high %v649, %v665
        %v708 = vunpack.c.l.s4 1934713408
        %v709 = vunpack.c.0.s8 %v708
        %v710 = vlaneseq
        %v711 = vshrl.u32 %v710, 7
        %v712 = vsub.s32 %v709, %v711
        %v713 = vrot.slane %v705, %v712
        %v715 = vunpack.c.l.s4 1934713408
        %v716 = vunpack.c.0.s8 %v715
        %v717 = vlaneseq
        %v718 = vshrl.u32 %v717, 7
        %v719 = vsub.s32 %v716, %v718
        %v720 = vrot.slane %v706, %v719
        %v721 = vcombine.low %v656, %v672
        %v722 = vcombine.high %v656, %v672
        %v724 = vunpack.c.l.s4 1934713408
        %v725 = vunpack.c.0.s8 %v724
        %v726 = vlaneseq
        %v727 = vshrl.u32 %v726, 7
        %v728 = vsub.s32 %v725, %v727
        %v729 = vrot.slane %v721, %v728
        %v731 = vunpack.c.l.s4 1934713408
        %v732 = vunpack.c.0.s8 %v731
        %v733 = vlaneseq
        %v734 = vshrl.u32 %v733, 7
        %v735 = vsub.s32 %v732, %v734
        %v736 = vrot.slane %v722, %v735
        %v737 = vcombine.low %v681, %v713
        %v738 = vcombine.high %v681, %v713
        %v739 = vcombine.low %v688, %v720
        %v740 = vcombine.high %v688, %v720
        %v741 = vcombine.low %v697, %v729
        %v742 = vcombine.high %v697, %v729
        %v743 = vcombine.low %v704, %v736
        %v744 = vcombine.high %v704, %v736
        %745 = vst.msk [vmem:[%s203] sm:$0xff] %vm211, %v737
        %746 = vst.msk [vmem:[%s203 + $0x8] sm:$0xff] %vm211, %v738
        %747 = vst.msk [vmem:[%s203 + $0x10] sm:$0xff] %vm211, %v739
        %748 = vst.msk [vmem:[%s203 + $0x18] sm:$0xff] %vm211, %v740
        %749 = vst.msk [vmem:[%s203 + $0x20] sm:$0xff] %vm211, %v741
        %750 = vst.msk [vmem:[%s203 + $0x28] sm:$0xff] %vm211, %v742
        %751 = vst.msk [vmem:[%s203 + $0x30] sm:$0xff] %vm211, %v743
        %752 = vst.msk [vmem:[%s203 + $0x38] sm:$0xff] %vm211, %v744
        %s753 = sand.u32 %s97, 1
        %s754 = scalar_lea.sflag [#allocation4], %s753
        %s755 = sand.u32 %s97, 1
        %s756 = smul.addr %s755, 64
        %s757 = scalar_lea.vmem [#allocation7], %s756
        // Predicated region
        $region41: #{tpu_custom_call.1} parent=31 // pred_check
          %p758 = pneg %p107
        $region42: #{tpu_custom_call.1} parent=31 // pred_check_branch
          %760 = sbr.rel (%p758) target = $region44
        $region43: #{tpu_custom_call.1} parent=31 // pred_region
          %s762 = ssub.s32 1024, 1024
          %763 = vsyncadd %s754, %s762
          %s764 = smul.addr %s21, 8
          %s765 = smul.addr %s764, 128
          %s766 = scalar_lea.hbm %s3, %s765
          %s767 = sshll.u32 %s757, 4
          %s768 = int_to_ptr.vmem [resolvable:$true] %s767
          %773 = dma.vmem_to_hbm [thread:$0]  %s768, 1024, %s766, %s754, 128, 128, 8
        $region44: #{tpu_custom_call.1} parent=31 // pred_fallthru
          _
      $region32: #{tpu_custom_call.1} parent=5 // pred_fallthru
        _
      %p774 = scmp.le.s32.totalorder 2, %s16
      // Predicated region
      $region45: #{tpu_custom_call.1} parent=5 // pred_check
        %p775 = pneg %p774
      $region46: #{tpu_custom_call.1} parent=5 // pred_check_branch
        %777 = sbr.rel (%p775) target = $region48
      $region47: #{tpu_custom_call.1} parent=5 // pred_region
        %s778 = ssub.s32 %s16, 2
        // Predicated region
        $region49: #{tpu_custom_call.1} parent=47 // pred_check
          %p779 = pneg %p113
        $region50: #{tpu_custom_call.1} parent=47 // pred_check_branch
          %781 = sbr.rel (%p779) target = $region52
        $region51: #{tpu_custom_call.1} parent=47 // pred_region
          %s782 = sand.u32 %s98, 1
          %s783 = scalar_lea.sflag [#allocation4], %s782
          %s784 = sand.u32 %s98, 1
          %s785 = smul.addr %s784, 64
          %s786 = scalar_lea.vmem [#allocation7], %s785
          %787 = dma.done %s783, 1024
        $region52: #{tpu_custom_call.1} parent=47 // pred_fallthru
          _
      $region48: #{tpu_custom_call.1} parent=5 // pred_fallthru
        _
    $region6: #{tpu_custom_call.1} parent=1 // loop_footer
      %s20 = sadd.s32 1, %s16
    $region7: #{tpu_custom_call.1} parent=1 // loop_footer_branch
      %15 = sbr.rel target = $region3
    $region8: #{tpu_custom_call.1} parent=1 // loop_exit
      _
    %788 = vsyncpa [#allocation3], 1
    %s789 = scalar_lea.sflag [#allocation3], 1
    %790 = vsyncpa %s789, 1
    %791 = vsyncpa [#allocation6], 1
    %792 = vsyncpa [#allocation4], 1
    %s793 = scalar_lea.sflag [#allocation4], 1
    %794 = vsyncpa %s793, 1

</llo_original>
